<compile_context>
chip_gen: v5e
topology: v5e:2x2
jax: 0.10.0
libtpu: 0.0.40
codegen_flags: <defaults>
</compile_context>

<pallas_src>
import functools

import jax
import jax.numpy as jnp
from jax.experimental import pallas as pl
from jax.experimental.pallas import tpu as pltpu

_LANE = 128          # lane-dim alignment target
_SUBLANE_BF16 = 16   # bf16 sublane packing


def _round_up(n, m):
    return ((n + m - 1) // m) * m


def _lsthm_kernel(cs_pad, act_ref, ctm_ref, w_ref, out_ref):
    # One fused MXU pass: [x|htm|ztm|spk|1|0-pad] @ [W;U;V;S;b_sum;0-pad].
    # bf16 operands, f32 accumulation.
    sums = jnp.dot(act_ref[...], w_ref[...], preferred_element_type=jnp.float32)

    # Lane-aligned static gate views (cs_pad is a multiple of 128).
    sig = lambda v: 0.5 * (jnp.tanh(0.5 * v) + 1.0)   # one EUP push per gate
    f_t = sig(sums[:, 0 * cs_pad:1 * cs_pad])
    i_t = sig(sums[:, 1 * cs_pad:2 * cs_pad])
    o_t = sig(sums[:, 2 * cs_pad:3 * cs_pad])
    ch_t = jnp.tanh(sums[:, 3 * cs_pad:4 * cs_pad])

    # Elementwise tail kept in f32: correct on all generations (v5e has no
    # bf16 VPU/EUP); a bf16 tail is an optional v6e/v7x-only EUP saving.
    c_t = f_t * ctm_ref[...] + i_t * ch_t
    h_t = jnp.tanh(c_t) * o_t

    # Lane-dense packed output slab [c_t | h_t]: two direct 128-aligned
    # stores, no concatenate temp.
    out_ref[:, :cs_pad] = c_t
    out_ref[:, cs_pad:] = h_t


def prepare_params(W, U, V, S, bW, bU, bV, bS, *, dtype=jnp.bfloat16):
    """Stack the transposed nn.Linear weights + summed bias into one MXU slab.

    W/U/V/S are (in_features, 4*cell) (transposed vs. PyTorch nn.Linear).
    Returns a (Kp, 4*cs_pad) slab with
      Kp     = round_up(in + cell + hybrid + speaker + 1, 128)  (zero rows)
      cs_pad = round_up(cell, 128)                              (zero cols/gate)
    The last non-padding row is the combined bias, consumed via a constant-1
    column in the activation.  Padded rows/columns are zero.
    """
    four_c = W.shape[1]
    cs = four_c // 4
    cs_pad = _round_up(cs, _LANE)

    bias = (bW + bU + bV + bS)[None, :]
    slab = jnp.concatenate([W, U, V, S, bias], axis=0)      # (K+1, 4*cs), f32
    kp1 = slab.shape[0]
    k_pad = _round_up(kp1, _LANE)

    # Per-gate column padding so every gate block is a full 128-lane group.
    slab = slab.reshape(kp1, 4, cs)
    slab = jnp.pad(slab, ((0, k_pad - kp1), (0, 0), (0, cs_pad - cs)))
    return slab.reshape(k_pad, 4 * cs_pad).astype(dtype)


def lsthm_forward(x, ctm, htm, ztm, speaker, w_stacked, cell_size,
                  *, block_batch=512):
    """Fused LSTHM1 forward step.  Returns (c_t, h_t), each (B, cell_size) f32."""
    B = x.shape[0]
    cs = cell_size
    cs_pad = _round_up(cs, _LANE)
    kp1 = x.shape[1] + htm.shape[1] + ztm.shape[1] + speaker.shape[1] + 1
    k_pad = _round_up(kp1, _LANE)
    assert w_stacked.shape == (k_pad, 4 * cs_pad), w_stacked.shape

    dt = w_stacked.dtype
    # Build the activation directly in the matmul dtype (no f32 intermediate):
    # [x | htm | ztm | speaker | 1 | zero-pad to 128-aligned K].
    pieces = [x.astype(dt), htm.astype(dt), ztm.astype(dt), speaker.astype(dt),
              jnp.ones((B, 1), dt)]
    if k_pad > kp1:
        pieces.append(jnp.zeros((B, k_pad - kp1), dt))
    act = jnp.concatenate(pieces, axis=-1)

    # Batch tiling: multiples of 16 (bf16 sublane packing); give the grid at
    # least 2 "parallel" steps when the batch allows it (v7x has 2 TCs).
    n_tiles_min = 2 if B >= 32 else 1
    bm = min(block_batch, _round_up(-(-B // n_tiles_min), _SUBLANE_BF16))
    b_pad = _round_up(B, bm)

    if b_pad != B:
        act = jnp.pad(act, ((0, b_pad - B), (0, 0)))
    # TODO(synk): ctm could be streamed as bf16 and upcast in-kernel if the
    # c-state recurrence precision budget allows; kept f32 here.
    ctm_p = jnp.pad(ctm.astype(jnp.float32),
                    ((0, b_pad - B), (0, cs_pad - cs)))

    out = pl.pallas_call(
        functools.partial(_lsthm_kernel, cs_pad),
        out_shape=jax.ShapeDtypeStruct((b_pad, 2 * cs_pad), jnp.float32),
        grid=(b_pad // bm,),
        in_specs=[
            pl.BlockSpec((bm, k_pad), lambda i: (i, 0)),          # activations
            pl.BlockSpec((bm, cs_pad), lambda i: (i, 0)),         # prev cell state
            pl.BlockSpec((k_pad, 4 * cs_pad), lambda i: (0, 0)),  # weights (VMEM-resident)
        ],
        out_specs=pl.BlockSpec((bm, 2 * cs_pad), lambda i: (i, 0)),
        compiler_params=pltpu.CompilerParams(
            dimension_semantics=("parallel",)),
    )(act, ctm_p, w_stacked)

    c_t = out[:B, :cs]
    h_t = out[:B, cs_pad:cs_pad + cs]
    return c_t, h_t


def lsthm_reference(x, ctm, htm, ztm, speaker, params, cell_size):
    """Pure-JAX f32 reference matching the PyTorch module semantics."""
    sums = (x @ params["W"] + htm @ params["U"] + ztm @ params["V"]
            + speaker @ params["S"] + params["b"])
    cs = cell_size
    f_t = jax.nn.sigmoid(sums[:, :cs])
    i_t = jax.nn.sigmoid(sums[:, cs:2 * cs])
    o_t = jax.nn.sigmoid(sums[:, 2 * cs:3 * cs])
    ch_t = jnp.tanh(sums[:, 3 * cs:])
    c_t = f_t * ctm + i_t * ch_t
    h_t = jnp.tanh(c_t) * o_t
    return c_t, h_t


if __name__ == "__main__":
    # Small, forward-consistent shapes.
    batch = 8
    cell_size = 32
    in_size = 16
    hybrid_in_size = 24
    speaker_dim = 8
    four_c = 4 * cell_size

    key = jax.random.PRNGKey(0)
    keys = jax.random.split(key, 13)

    # Deterministic parameter init (nn.Linear-shaped, stored transposed).
    scale = 0.1
    W = scale * jax.random.normal(keys[0], (in_size, four_c), jnp.float32)
    U = scale * jax.random.normal(keys[1], (cell_size, four_c), jnp.float32)
    V = scale * jax.random.normal(keys[2], (hybrid_in_size, four_c), jnp.float32)
    S = scale * jax.random.normal(keys[3], (speaker_dim, four_c), jnp.float32)
    bW = scale * jax.random.normal(keys[4], (four_c,), jnp.float32)
    bU = scale * jax.random.normal(keys[5], (four_c,), jnp.float32)
    bV = scale * jax.random.normal(keys[6], (four_c,), jnp.float32)
    bS = scale * jax.random.normal(keys[7], (four_c,), jnp.float32)

    # Param glue: one lane-/K-padded bf16 slab with bias folded in.
    w_stacked = prepare_params(W, U, V, S, bW, bU, bV, bS)

    # Reference params (f32, un-fused).
    ref_params = {"W": W, "U": U, "V": V, "S": S,
                  "b": (bW + bU + bV + bS).reshape(1, four_c)}

    # Inputs.
    x       = jax.random.normal(keys[8],  (batch, in_size), jnp.float32)
    ctm     = jax.random.normal(keys[9],  (batch, cell_size), jnp.float32)
    htm     = jax.random.normal(keys[10], (batch, cell_size), jnp.float32)
    ztm     = jax.random.normal(keys[11], (batch, hybrid_in_size), jnp.float32)
    speaker = jax.random.normal(keys[12], (batch, speaker_dim), jnp.float32)

    c_t, h_t = lsthm_forward(x, ctm, htm, ztm, speaker, w_stacked, cell_size)
    jax.block_until_ready((c_t, h_t))

    # Numerical check against the pure-JAX f32 reference (tolerance relaxed
    # for the bf16 matmul operands; accumulation and gate tail are f32).
    c_ref, h_ref = lsthm_reference(x, ctm, htm, ztm, speaker, ref_params, cell_size)
    assert jnp.allclose(c_t, c_ref, atol=2e-2, rtol=2e-2)
    assert jnp.allclose(h_t, h_ref, atol=2e-2, rtol=2e-2)

    print("KERNEL_OK")
</pallas_src>

<mosaic_0001>
module attributes {stable_mosaic.version = 11 : i64} {
  func.func @_lsthm_kernel(%arg0: i32, %arg1: memref<16x128xbf16, #tpu.memory_space<vmem>>, %arg2: memref<16x128xf32, #tpu.memory_space<vmem>>, %arg3: memref<128x512xbf16, #tpu.memory_space<vmem>>, %arg4: memref<16x256xf32, #tpu.memory_space<vmem>>) attributes {dimension_semantics = [#tpu.dimension_semantics<parallel>], iteration_bounds = array<i64: 1>, scalar_prefetch = 0 : i64, scratch_operands = 0 : i64, tpu.core_type = #tpu.core_type<tc>, window_params = [{transform_indices = @transform_0, window_bounds = array<i64: 16, 128>}, {transform_indices = @transform_1, window_bounds = array<i64: 16, 128>}, {pipeline_mode = #tpu.pipeline_mode<synchronous>, transform_indices = @transform_2, window_bounds = array<i64: 128, 512>}, {transform_indices = @transform_3, window_bounds = array<i64: 16, 256>}]} {
    %c0 = arith.constant 0 : index
    %c0_0 = arith.constant 0 : index
    %0 = vector.load %arg1[%c0, %c0_0] : memref<16x128xbf16, #tpu.memory_space<vmem>>, vector<16x128xbf16>
    %c0_1 = arith.constant 0 : index
    %c0_2 = arith.constant 0 : index
    %1 = vector.load %arg3[%c0_1, %c0_2] : memref<128x512xbf16, #tpu.memory_space<vmem>>, vector<128x512xbf16>
    %cst = arith.constant dense<0.000000e+00> : vector<16x512xf32>
    %2 = tpu.matmul %0, %1, %cst {dimension_numbers = #tpu.dot_dimension_numbers<[1], [0], [0], [1], [0, 0, 1, 1], [], []>} : vector<16x128xbf16>, vector<128x512xbf16>, vector<16x512xf32> -> vector<16x512xf32>
    %3 = vector.extract_strided_slice %2 {offsets = [0, 0], sizes = [16, 128], strides = [1, 1]} : vector<16x512xf32> to vector<16x128xf32>
    %cst_3 = arith.constant 5.000000e-01 : f32
    %4 = vector.broadcast %cst_3 : f32 to vector<16x128xf32>
    %5 = arith.mulf %4, %3 : vector<16x128xf32>
    %6 = math.tanh %5 : vector<16x128xf32>
    %cst_4 = arith.constant 1.000000e+00 : f32
    %7 = vector.broadcast %cst_4 : f32 to vector<16x128xf32>
    %8 = arith.addf %6, %7 : vector<16x128xf32>
    %cst_5 = arith.constant 5.000000e-01 : f32
    %9 = vector.broadcast %cst_5 : f32 to vector<16x128xf32>
    %10 = arith.mulf %9, %8 : vector<16x128xf32>
    %11 = vector.extract_strided_slice %2 {offsets = [0, 128], sizes = [16, 128], strides = [1, 1]} : vector<16x512xf32> to vector<16x128xf32>
    %cst_6 = arith.constant 5.000000e-01 : f32
    %12 = vector.broadcast %cst_6 : f32 to vector<16x128xf32>
    %13 = arith.mulf %12, %11 : vector<16x128xf32>
    %14 = math.tanh %13 : vector<16x128xf32>
    %cst_7 = arith.constant 1.000000e+00 : f32
    %15 = vector.broadcast %cst_7 : f32 to vector<16x128xf32>
    %16 = arith.addf %14, %15 : vector<16x128xf32>
    %cst_8 = arith.constant 5.000000e-01 : f32
    %17 = vector.broadcast %cst_8 : f32 to vector<16x128xf32>
    %18 = arith.mulf %17, %16 : vector<16x128xf32>
    %19 = vector.extract_strided_slice %2 {offsets = [0, 256], sizes = [16, 128], strides = [1, 1]} : vector<16x512xf32> to vector<16x128xf32>
    %cst_9 = arith.constant 5.000000e-01 : f32
    %20 = vector.broadcast %cst_9 : f32 to vector<16x128xf32>
    %21 = arith.mulf %20, %19 : vector<16x128xf32>
    %22 = math.tanh %21 : vector<16x128xf32>
    %cst_10 = arith.constant 1.000000e+00 : f32
    %23 = vector.broadcast %cst_10 : f32 to vector<16x128xf32>
    %24 = arith.addf %22, %23 : vector<16x128xf32>
    %cst_11 = arith.constant 5.000000e-01 : f32
    %25 = vector.broadcast %cst_11 : f32 to vector<16x128xf32>
    %26 = arith.mulf %25, %24 : vector<16x128xf32>
    %27 = vector.extract_strided_slice %2 {offsets = [0, 384], sizes = [16, 128], strides = [1, 1]} : vector<16x512xf32> to vector<16x128xf32>
    %28 = math.tanh %27 : vector<16x128xf32>
    %c0_12 = arith.constant 0 : index
    %c0_13 = arith.constant 0 : index
    %29 = vector.load %arg2[%c0_12, %c0_13] : memref<16x128xf32, #tpu.memory_space<vmem>>, vector<16x128xf32>
    %30 = arith.mulf %10, %29 : vector<16x128xf32>
    %31 = arith.mulf %18, %28 : vector<16x128xf32>
    %32 = arith.addf %30, %31 : vector<16x128xf32>
    %33 = math.tanh %32 : vector<16x128xf32>
    %34 = arith.mulf %33, %26 : vector<16x128xf32>
    %c0_14 = arith.constant 0 : index
    %c0_15 = arith.constant 0 : index
    %35 = vector.load %arg4[%c0_14, %c0_15] : memref<16x256xf32, #tpu.memory_space<vmem>>, vector<16x128xf32>
    tpu.vector_store %arg4[%c0_14, %c0_15], %32 {strides = array<i32>} : memref<16x256xf32, #tpu.memory_space<vmem>>, vector<16x128xf32>,
    %c0_16 = arith.constant 0 : index
    %c128 = arith.constant 128 : index
    %36 = vector.load %arg4[%c0_16, %c128] : memref<16x256xf32, #tpu.memory_space<vmem>>, vector<16x128xf32>
    tpu.vector_store %arg4[%c0_16, %c128], %34 {strides = array<i32>} : memref<16x256xf32, #tpu.memory_space<vmem>>, vector<16x128xf32>,
    return
  }
  func.func @transform_0(%arg0: i32) -> (i32, i32) {
    %c0_i32 = arith.constant 0 : i32
    %c0_i32_0 = arith.constant 0 : i32
    return %arg0, %c0_i32 : i32, i32
  }
  func.func @transform_1(%arg0: i32) -> (i32, i32) {
    %c0_i32 = arith.constant 0 : i32
    %c0_i32_0 = arith.constant 0 : i32
    return %arg0, %c0_i32 : i32, i32
  }
  func.func @transform_2(%arg0: i32) -> (i32, i32) {
    %c0_i32 = arith.constant 0 : i32
    %c0_i32_0 = arith.constant 0 : i32
    %c0_i32_1 = arith.constant 0 : i32
    return %c0_i32, %c0_i32_0 : i32, i32
  }
  func.func @transform_3(%arg0: i32) -> (i32, i32) {
    %c0_i32 = arith.constant 0 : i32
    %c0_i32_0 = arith.constant 0 : i32
    return %arg0, %c0_i32 : i32, i32
  }
}

</mosaic_0001>

<llo_original>
// kernel: tpu_custom_call.1
$region0: #{tpu_custom_call.1}
  #allocation0 [shape = 'u32[]', space=smem, size = 0x4, offset = 0x4, fixed_abs, tag = 'smem constant byte address 0x4 - core index']
  #allocation1 [shape = 'u32[72,128]{1,0:T(1,128)}', space=vmem, size = 0x9000, scoped, tag = 'internal scratch']
  %s0 = inlined_call_operand.hbm [shape: bf16[16,128], index: 0, kind: input, shape index: {}]
  %s1 = inlined_call_operand.hbm [shape: f32[16,128], index: 1, kind: input, shape index: {}]
  %s2 = inlined_call_operand.hbm [shape: bf16[128,512], index: 2, kind: input, shape index: {}]
  %s3 = inlined_call_operand.hbm [shape: f32[16,256], index: 3, kind: output, shape index: {}]
  %s4 = sld [smem:[#allocation0]]
  $region34: #{tpu_custom_call.1} parent=0
    _
  %s6 = ssub.s32 1, %s4
  %s7 = scalar_select 0, %s6, %s4
  $region1: #{tpu_custom_call.1} parent=0
    #allocation2 [shape = 'u8[4096]{0}', space=vmem, size = 0x1000, scoped, tag = 'input window, operand 0, single buffered']
    #allocation3 [shape = 's32[1]{0}', space=sflag, size = 0x4, scoped, tag = 'scoped memory for tpu_custom_call.1']
    #allocation4 [shape = 's32[1]{0}', space=sflag, size = 0x4, scoped, tag = 'scoped memory for tpu_custom_call.1']
    #allocation5 [shape = 'u8[8192]{0}', space=vmem, size = 0x2000, scoped, tag = 'input window, operand 1, single buffered']
    #allocation6 [shape = 's32[1]{0}', space=sflag, size = 0x4, scoped, tag = 'scoped memory for tpu_custom_call.1']
    #allocation7 [shape = 'u8[131072]{0}', space=vmem, size = 0x20000, scoped, tag = 'input window, operand 2, single buffered']
    #allocation8 [shape = 'u8[16384]{0}', space=vmem, size = 0x4000, scoped, tag = 'output window, operand 0, single buffered']
    %8 = vsyncpa [#allocation3], 0
    %9 = vsyncpa [#allocation6], 0
    %10 = vsyncpa [#allocation4], 0
    // Predicated region
    $region2: #{tpu_custom_call.1} parent=1 // pred_check
      _
    $region3: #{tpu_custom_call.1} parent=1 // pred_check_branch
      %12 = sbr.rel (0) target = $region5
    $region4: #{tpu_custom_call.1} parent=1 // pred_region
      %14 = vsyncadd [#allocation3], 0
      %s15 = sshll.u32 %s0, 4
      %s16 = int_to_ptr.hbm [resolvable:$true] %s15
      %s17 = sshll.u32 [#allocation2], 4
      %s18 = int_to_ptr.vmem [resolvable:$true] %s17
      %23 = dma.hbm_to_vmem [thread:$0]  %s16, 128, %s18, [#allocation3], 64, 64, 4
    $region5: #{tpu_custom_call.1} parent=1 // pred_fallthru
      _
    // Predicated region
    $region6: #{tpu_custom_call.1} parent=1 // pred_check
      _
    $region7: #{tpu_custom_call.1} parent=1 // pred_check_branch
      %25 = sbr.rel (0) target = $region9
    $region8: #{tpu_custom_call.1} parent=1 // pred_region
      %27 = vsyncadd [#allocation6], 0
      %s28 = sshll.u32 %s1, 4
      %s29 = int_to_ptr.hbm [resolvable:$true] %s28
      %s30 = sshll.u32 [#allocation5], 4
      %s31 = int_to_ptr.vmem [resolvable:$true] %s30
      %36 = dma.hbm_to_vmem [thread:$0]  %s29, 256, %s31, [#allocation6], 128, 128, 8
    $region9: #{tpu_custom_call.1} parent=1 // pred_fallthru
      _
    // Predicated region
    $region10: #{tpu_custom_call.1} parent=1 // pred_check
      _
    $region11: #{tpu_custom_call.1} parent=1 // pred_check_branch
      %38 = sbr.rel (0) target = $region13
    $region12: #{tpu_custom_call.1} parent=1 // pred_region
      %40 = vsyncadd [#allocation6], 0
      %s41 = sshll.u32 %s2, 4
      %s42 = int_to_ptr.hbm [resolvable:$true] %s41
      %s43 = sshll.u32 [#allocation7], 4
      %s44 = int_to_ptr.vmem [resolvable:$true] %s43
      %49 = dma.hbm_to_vmem [thread:$0]  %s42, 4096, %s44, [#allocation6], 256, 256, 16
    $region13: #{tpu_custom_call.1} parent=1 // pred_fallthru
      _
    // Predicated region
    $region14: #{tpu_custom_call.1} parent=1 // pred_check
      _
    $region15: #{tpu_custom_call.1} parent=1 // pred_check_branch
      %51 = sbr.rel (0) target = $region17
    $region16: #{tpu_custom_call.1} parent=1 // pred_region
      %53 = dma.done [#allocation3], 128
    $region17: #{tpu_custom_call.1} parent=1 // pred_fallthru
      _
    // Predicated region
    $region18: #{tpu_custom_call.1} parent=1 // pred_check
      _
    $region19: #{tpu_custom_call.1} parent=1 // pred_check_branch
      %55 = sbr.rel (0) target = $region21
    $region20: #{tpu_custom_call.1} parent=1 // pred_region
      %57 = dma.done [#allocation6], 256
    $region21: #{tpu_custom_call.1} parent=1 // pred_fallthru
      _
    // Predicated region
    $region22: #{tpu_custom_call.1} parent=1 // pred_check
      _
    $region23: #{tpu_custom_call.1} parent=1 // pred_check_branch
      %59 = sbr.rel (0) target = $region25
    $region24: #{tpu_custom_call.1} parent=1 // pred_region
      %61 = dma.done [#allocation6], 4096
    $region25: #{tpu_custom_call.1} parent=1 // pred_fallthru
      _
    %v62 = vld [vmem:[#allocation2] sm:$0xf]
    %v63 = vld [vmem:[#allocation2 + $0x4] sm:$0xf]
    %v64 = vld [vmem:[#allocation7] sm:$0xff]
    %v65 = vld [vmem:[#allocation7 + $0x8] sm:$0xff]
    %v66 = vld [vmem:[#allocation7 + $0x10] sm:$0xff]
    %v67 = vld [vmem:[#allocation7 + $0x18] sm:$0xff]
    %v68 = vld [vmem:[#allocation7 + $0x20] sm:$0xff]
    %v69 = vld [vmem:[#allocation7 + $0x28] sm:$0xff]
    %v70 = vld [vmem:[#allocation7 + $0x30] sm:$0xff]
    %v71 = vld [vmem:[#allocation7 + $0x38] sm:$0xff]
    %v72 = vld [vmem:[#allocation7 + $0x40] sm:$0xff]
    %v73 = vld [vmem:[#allocation7 + $0x48] sm:$0xff]
    %v74 = vld [vmem:[#allocation7 + $0x50] sm:$0xff]
    %v75 = vld [vmem:[#allocation7 + $0x58] sm:$0xff]
    %v76 = vld [vmem:[#allocation7 + $0x60] sm:$0xff]
    %v77 = vld [vmem:[#allocation7 + $0x68] sm:$0xff]
    %v78 = vld [vmem:[#allocation7 + $0x70] sm:$0xff]
    %v79 = vld [vmem:[#allocation7 + $0x78] sm:$0xff]
    %v80 = vld [vmem:[#allocation7 + $0x80] sm:$0xff]
    %v81 = vld [vmem:[#allocation7 + $0x88] sm:$0xff]
    %v82 = vld [vmem:[#allocation7 + $0x90] sm:$0xff]
    %v83 = vld [vmem:[#allocation7 + $0x98] sm:$0xff]
    %v84 = vld [vmem:[#allocation7 + $0xa0] sm:$0xff]
    %v85 = vld [vmem:[#allocation7 + $0xa8] sm:$0xff]
    %v86 = vld [vmem:[#allocation7 + $0xb0] sm:$0xff]
    %v87 = vld [vmem:[#allocation7 + $0xb8] sm:$0xff]
    %v88 = vld [vmem:[#allocation7 + $0xc0] sm:$0xff]
    %v89 = vld [vmem:[#allocation7 + $0xc8] sm:$0xff]
    %v90 = vld [vmem:[#allocation7 + $0xd0] sm:$0xff]
    %v91 = vld [vmem:[#allocation7 + $0xd8] sm:$0xff]
    %v92 = vld [vmem:[#allocation7 + $0xe0] sm:$0xff]
    %v93 = vld [vmem:[#allocation7 + $0xe8] sm:$0xff]
    %v94 = vld [vmem:[#allocation7 + $0xf0] sm:$0xff]
    %v95 = vld [vmem:[#allocation7 + $0xf8] sm:$0xff]
    %v98 = vunpack.c.l.b16 %v62
    %v99 = vunpack.c.l.b16 %v63
    %v100 = vpack.c.b16 %v99, %v98
    %v134 = vunpack.c.l.b16 %v64
    %v135 = vunpack.c.h.b16 %v64
    %v136 = vunpack.c.l.b16 %v65
    %v137 = vunpack.c.h.b16 %v65
    %v138 = vunpack.c.l.b16 %v66
    %v139 = vunpack.c.h.b16 %v66
    %v140 = vunpack.c.l.b16 %v67
    %v141 = vunpack.c.h.b16 %v67
    %v142 = vunpack.c.l.b16 %v68
    %v143 = vunpack.c.h.b16 %v68
    %v144 = vunpack.c.l.b16 %v69
    %v145 = vunpack.c.h.b16 %v69
    %v146 = vunpack.c.l.b16 %v70
    %v147 = vunpack.c.h.b16 %v70
    %v148 = vunpack.c.l.b16 %v71
    %v149 = vunpack.c.h.b16 %v71
    %v150 = vunpack.c.l.b16 %v72
    %v151 = vunpack.c.h.b16 %v72
    %v152 = vunpack.c.l.b16 %v73
    %v153 = vunpack.c.h.b16 %v73
    %v154 = vunpack.c.l.b16 %v74
    %v155 = vunpack.c.h.b16 %v74
    %v156 = vunpack.c.l.b16 %v75
    %v157 = vunpack.c.h.b16 %v75
    %v158 = vunpack.c.l.b16 %v76
    %v159 = vunpack.c.h.b16 %v76
    %v160 = vunpack.c.l.b16 %v77
    %v161 = vunpack.c.h.b16 %v77
    %v162 = vunpack.c.l.b16 %v78
    %v163 = vunpack.c.h.b16 %v78
    %v164 = vunpack.c.l.b16 %v79
    %v165 = vunpack.c.h.b16 %v79
    %v166 = vunpack.c.l.b16 %v80
    %v167 = vunpack.c.h.b16 %v80
    %v168 = vunpack.c.l.b16 %v81
    %v169 = vunpack.c.h.b16 %v81
    %v170 = vunpack.c.l.b16 %v82
    %v171 = vunpack.c.h.b16 %v82
    %v172 = vunpack.c.l.b16 %v83
    %v173 = vunpack.c.h.b16 %v83
    %v174 = vunpack.c.l.b16 %v84
    %v175 = vunpack.c.h.b16 %v84
    %v176 = vunpack.c.l.b16 %v85
    %v177 = vunpack.c.h.b16 %v85
    %v178 = vunpack.c.l.b16 %v86
    %v179 = vunpack.c.h.b16 %v86
    %v180 = vunpack.c.l.b16 %v87
    %v181 = vunpack.c.h.b16 %v87
    %v182 = vunpack.c.l.b16 %v88
    %v183 = vunpack.c.h.b16 %v88
    %v184 = vunpack.c.l.b16 %v89
    %v185 = vunpack.c.h.b16 %v89
    %v186 = vunpack.c.l.b16 %v90
    %v187 = vunpack.c.h.b16 %v90
    %v188 = vunpack.c.l.b16 %v91
    %v189 = vunpack.c.h.b16 %v91
    %v190 = vunpack.c.l.b16 %v92
    %v191 = vunpack.c.h.b16 %v92
    %v192 = vunpack.c.l.b16 %v93
    %v193 = vunpack.c.h.b16 %v93
    %v194 = vunpack.c.l.b16 %v94
    %v195 = vunpack.c.h.b16 %v94
    %v196 = vunpack.c.l.b16 %v95
    %v197 = vunpack.c.h.b16 %v95
    %v198 = vpack.c.b16 %v138, %v134
    %v199 = vpack.c.b16 %v139, %v135
    %v200 = vpack.c.b16 %v140, %v136
    %v201 = vpack.c.b16 %v141, %v137
    %v202 = vpack.c.b16 %v146, %v142
    %v203 = vpack.c.b16 %v147, %v143
    %v204 = vpack.c.b16 %v148, %v144
    %v205 = vpack.c.b16 %v149, %v145
    %v206 = vpack.c.b16 %v154, %v150
    %v207 = vpack.c.b16 %v155, %v151
    %v208 = vpack.c.b16 %v156, %v152
    %v209 = vpack.c.b16 %v157, %v153
    %v210 = vpack.c.b16 %v162, %v158
    %v211 = vpack.c.b16 %v163, %v159
    %v212 = vpack.c.b16 %v164, %v160
    %v213 = vpack.c.b16 %v165, %v161
    %v214 = vpack.c.b16 %v170, %v166
    %v215 = vpack.c.b16 %v171, %v167
    %v216 = vpack.c.b16 %v172, %v168
    %v217 = vpack.c.b16 %v173, %v169
    %v218 = vpack.c.b16 %v178, %v174
    %v219 = vpack.c.b16 %v179, %v175
    %v220 = vpack.c.b16 %v180, %v176
    %v221 = vpack.c.b16 %v181, %v177
    %v222 = vpack.c.b16 %v186, %v182
    %v223 = vpack.c.b16 %v187, %v183
    %v224 = vpack.c.b16 %v188, %v184
    %v225 = vpack.c.b16 %v189, %v185
    %v226 = vpack.c.b16 %v194, %v190
    %v227 = vpack.c.b16 %v195, %v191
    %v228 = vpack.c.b16 %v196, %v192
    %v229 = vpack.c.b16 %v197, %v193
    %262 = vmatpush.bf16.msra.mxu0 %v226
    %263 = vmatpush.bf16.msra.mxu0 %v222
    %264 = vmatpush.bf16.msra.mxu0 %v218
    %265 = vmatpush.bf16.msra.mxu0 %v214
    %266 = vmatpush.bf16.msra.mxu0 %v210
    %267 = vmatpush.bf16.msra.mxu0 %v206
    %268 = vmatpush.bf16.msra.mxu0 %v202
    %269 = vmatpush.bf16.msra.mxu0 %v198
    %270 = vmatmul.bf16.gmra.mxu0 %v100
    %v271 = vpop.f32.mrf.mxu0
    %v272 = vadd.f32 0.0, %v271
    %v273 = vpop.f32.mrf.mxu0
    %v274 = vadd.f32 0.0, %v273
    %275 = vdwg.mxu0
    %276 = vmatpush.bf16.msra.mxu0 %v227
    %277 = vmatpush.bf16.msra.mxu0 %v223
    %278 = vmatpush.bf16.msra.mxu0 %v219
    %279 = vmatpush.bf16.msra.mxu0 %v215
    %280 = vmatpush.bf16.msra.mxu0 %v211
    %281 = vmatpush.bf16.msra.mxu0 %v207
    %282 = vmatpush.bf16.msra.mxu0 %v203
    %283 = vmatpush.bf16.msra.mxu0 %v199
    %284 = vmatmul.bf16.gmra.mxu0 %v100
    %v285 = vpop.f32.mrf.mxu0
    %v286 = vadd.f32 0.0, %v285
    %v287 = vpop.f32.mrf.mxu0
    %v288 = vadd.f32 0.0, %v287
    %289 = vdwg.mxu0
    %290 = vmatpush.bf16.msra.mxu0 %v228
    %291 = vmatpush.bf16.msra.mxu0 %v224
    %292 = vmatpush.bf16.msra.mxu0 %v220
    %293 = vmatpush.bf16.msra.mxu0 %v216
    %294 = vmatpush.bf16.msra.mxu0 %v212
    %295 = vmatpush.bf16.msra.mxu0 %v208
    %296 = vmatpush.bf16.msra.mxu0 %v204
    %297 = vmatpush.bf16.msra.mxu0 %v200
    %298 = vmatmul.bf16.gmra.mxu0 %v100
    %v299 = vpop.f32.mrf.mxu0
    %v300 = vadd.f32 0.0, %v299
    %v301 = vpop.f32.mrf.mxu0
    %v302 = vadd.f32 0.0, %v301
    %303 = vdwg.mxu0
    %304 = vmatpush.bf16.msra.mxu0 %v229
    %305 = vmatpush.bf16.msra.mxu0 %v225
    %306 = vmatpush.bf16.msra.mxu0 %v221
    %307 = vmatpush.bf16.msra.mxu0 %v217
    %308 = vmatpush.bf16.msra.mxu0 %v213
    %309 = vmatpush.bf16.msra.mxu0 %v209
    %310 = vmatpush.bf16.msra.mxu0 %v205
    %311 = vmatpush.bf16.msra.mxu0 %v201
    %312 = vmatmul.bf16.gmra.mxu0 %v100
    %v313 = vpop.f32.mrf.mxu0
    %v314 = vadd.f32 0.0, %v313
    %v315 = vpop.f32.mrf.mxu0
    %v316 = vadd.f32 0.0, %v315
    %317 = vdwg.mxu0
    %v318 = vmul.f32 %v272, 0.5
    %v319 = vmul.f32 %v274, 0.5
    %v320 = vtanh.pop %v318
    %v321 = vtanh.pop %v319
    %v322 = vadd.f32 %v320, 1.0
    %v323 = vadd.f32 %v321, 1.0
    %v324 = vmul.f32 %v322, 0.5
    %v325 = vmul.f32 %v323, 0.5
    %v326 = vmul.f32 %v286, 0.5
    %v327 = vmul.f32 %v288, 0.5
    %v328 = vtanh.pop %v326
    %v329 = vtanh.pop %v327
    %v330 = vadd.f32 %v328, 1.0
    %v331 = vadd.f32 %v329, 1.0
    %v332 = vmul.f32 %v330, 0.5
    %v333 = vmul.f32 %v331, 0.5
    %v334 = vmul.f32 %v300, 0.5
    %v335 = vmul.f32 %v302, 0.5
    %v336 = vtanh.pop %v334
    %v337 = vtanh.pop %v335
    %v338 = vadd.f32 %v336, 1.0
    %v339 = vadd.f32 %v337, 1.0
    %v340 = vmul.f32 %v338, 0.5
    %v341 = vmul.f32 %v339, 0.5
    %v342 = vtanh.pop %v314
    %v343 = vtanh.pop %v316
    %v344 = vld [vmem:[#allocation5] sm:$0xff]
    %v345 = vld [vmem:[#allocation5 + $0x8] sm:$0xff]
    %v346 = vmul.f32 %v324, %v344
    %v347 = vmul.f32 %v325, %v345
    %v348 = vmul.f32 %v332, %v342
    %v349 = vmul.f32 %v333, %v343
    %v350 = vadd.f32 %v346, %v348
    %v351 = vadd.f32 %v347, %v349
    %v352 = vtanh.pop %v350
    %v353 = vtanh.pop %v351
    %v354 = vmul.f32 %v352, %v340
    %v355 = vmul.f32 %v353, %v341
    %356 = vst [vmem:[#allocation8] sm:$0xff] %v350
    %357 = vst [vmem:[#allocation8 + $0x10] sm:$0xff] %v351
    %358 = vst [vmem:[#allocation8 + $0x8] sm:$0xff] %v354
    %359 = vst [vmem:[#allocation8 + $0x18] sm:$0xff] %v355
    // Predicated region
    $region26: #{tpu_custom_call.1} parent=1 // pred_check
      _
    $region27: #{tpu_custom_call.1} parent=1 // pred_check_branch
      %361 = sbr.rel (0) target = $region29
    $region28: #{tpu_custom_call.1} parent=1 // pred_region
      %363 = vsyncadd [#allocation4], 0
      %s364 = sshll.u32 [#allocation8], 4
      %s365 = int_to_ptr.vmem [resolvable:$true] %s364
      %s366 = sshll.u32 %s3, 4
      %s367 = int_to_ptr.hbm [resolvable:$true] %s366
      %372 = dma.vmem_to_hbm [thread:$0]  %s365, 512, %s367, [#allocation4], 256, 256, 16
    $region29: #{tpu_custom_call.1} parent=1 // pred_fallthru
      _
    // Predicated region
    $region30: #{tpu_custom_call.1} parent=1 // pred_check
      _
    $region31: #{tpu_custom_call.1} parent=1 // pred_check_branch
      %374 = sbr.rel (0) target = $region33
    $region32: #{tpu_custom_call.1} parent=1 // pred_region
      %376 = dma.done [#allocation4], 512
    $region33: #{tpu_custom_call.1} parent=1 // pred_fallthru
      _
    %377 = vsyncpa [#allocation3], 1
    %378 = vsyncpa [#allocation6], 1
    %379 = vsyncpa [#allocation4], 1

</llo_original>
